<compile_context>
chip_gen: v7x
topology: tpu7x:2x2x1
jax: 0.10.0
libtpu: 0.0.40
codegen_flags: <defaults>
</compile_context>

<pallas_src>
import functools

import jax
import jax.numpy as jnp
from jax.experimental import pallas as pl
from jax.experimental.pallas import tpu as pltpu


# ---------------------------------------------------------------------------
# Pallas kernel: tiled matmul + per-output-column affine + activation
# ---------------------------------------------------------------------------
def _matmul_affine_act_kernel(a_ref, w_ref, scale_ref, shift_ref, o_ref,
                              acc_ref, *, act):
    @pl.when(pl.program_id(2) == 0)
    def _init():
        acc_ref[...] = jnp.zeros_like(acc_ref)

    acc_ref[...] += jnp.dot(a_ref[...], w_ref[...],
                            preferred_element_type=jnp.float32)

    @pl.when(pl.program_id(2) == pl.num_programs(2) - 1)
    def _finalize():
        y = acc_ref[...] * scale_ref[...] + shift_ref[...]
        if act == "leaky":
            y = jnp.where(y > 0, y, 0.2 * y)            # LeakyReLU(0.2)
        elif act == "tanh_out":
            y = 0.5 * jnp.tanh(y) + 0.5                 # Tanh then 0.5*x + 0.5
        o_ref[...] = y.astype(o_ref.dtype)


def _round_up(x, m):
    return x + (-x) % m


def _pick_tile(dim, pref, align):
    return pref if dim >= pref else _round_up(dim, align)


def _fused_matmul_tiled(a, w, scale, shift, act,
                        tm_pref=256, tn_pref=256, tk_pref=512):
    """a: (M, K)  w: (K, N)  scale/shift: (N,) -> (M, N) float32."""
    M, K = a.shape
    N = w.shape[1]
    tm = _pick_tile(M, tm_pref, 8)
    tn = _pick_tile(N, tn_pref, 128)
    tk = _pick_tile(K, tk_pref, 128)
    Mp, Np, Kp = _round_up(M, tm), _round_up(N, tn), _round_up(K, tk)

    # bf16 operands for the MXU; accumulation / epilogue stays f32.
    a_p = jnp.pad(a.astype(jnp.bfloat16), ((0, Mp - M), (0, Kp - K)))
    w_p = jnp.pad(w.astype(jnp.bfloat16), ((0, Kp - K), (0, Np - N)))
    scale_p = jnp.pad(scale.astype(jnp.float32).reshape(1, N),
                      ((0, 0), (0, Np - N)))
    shift_p = jnp.pad(shift.astype(jnp.float32).reshape(1, N),
                      ((0, 0), (0, Np - N)))

    grid = (Mp // tm, Np // tn, Kp // tk)
    kernel = functools.partial(_matmul_affine_act_kernel, act=act)
    flops = 2 * Mp * Np * Kp
    transcendentals = Mp * Np if act == "tanh_out" else 0
    bytes_accessed = (Mp * Kp + Kp * Np) * 2 + Mp * Np * 4 + 2 * Np * 4

    out = pl.pallas_call(
        kernel,
        out_shape=jax.ShapeDtypeStruct((Mp, Np), jnp.float32),
        grid_spec=pltpu.PrefetchScalarGridSpec(
            num_scalar_prefetch=0,
            grid=grid,
            in_specs=[
                pl.BlockSpec((tm, tk), lambda i, j, k: (i, k)),
                pl.BlockSpec((tk, tn), lambda i, j, k: (k, j)),
                pl.BlockSpec((1, tn), lambda i, j, k: (0, j)),
                pl.BlockSpec((1, tn), lambda i, j, k: (0, j)),
            ],
            out_specs=pl.BlockSpec((tm, tn), lambda i, j, k: (i, j)),
            scratch_shapes=[pltpu.VMEM((tm, tn), jnp.float32)],
        ),
        compiler_params=pltpu.CompilerParams(
            dimension_semantics=("parallel", "parallel", "arbitrary"),
            vmem_limit_bytes=64 * 1024 * 1024),
        cost_estimate=pl.CostEstimate(
            flops=flops, transcendentals=transcendentals,
            bytes_accessed=bytes_accessed),
    )(a_p, w_p, scale_p, shift_p)
    return out[:M, :N]


def fused_matmul(a, w, scale, shift, act):
    """Dispatcher: for N == 1 (final num_chan=1 layer) run the transposed
    problem so the big spatial dim lands on the lane axis instead of padding
    a single output channel up to 128 lanes."""
    M, K = a.shape
    N = w.shape[1]
    if N == 1:
        s0 = scale.reshape(-1)[0]
        b0 = shift.reshape(-1)[0]
        out_t = _fused_matmul_tiled(
            w.reshape(1, K).astype(jnp.float32), a.T,
            jnp.full((M,), s0, jnp.float32),
            jnp.full((M,), b0, jnp.float32), act)        # (1, M), lane-dense
        return out_t.T                                   # (M, 1)
    return _fused_matmul_tiled(a, w, scale, shift, act)


# ---------------------------------------------------------------------------
# ConvTranspose2d glue (NHWC, no dilation zeros)
# ---------------------------------------------------------------------------
def _im2col_nhwc(x, k):
    """x: (B, H, W, C) -> patches (B*Ho*Wo, k*k*C) ordered (ky, kx, ci)."""
    B, H, W, C = x.shape
    Ho, Wo = H - k + 1, W - k + 1
    cols = [x[:, ky:ky + Ho, kx:kx + Wo, :]
            for ky in range(k) for kx in range(k)]
    p = jnp.stack(cols, axis=3)                          # (B, Ho, Wo, k*k, C)
    return p.reshape(B * Ho * Wo, k * k * C), (B, Ho, Wo)


def _flipped_weight(w):
    """(Cin, Cout, k, k) -> (k, k, Cin, Cout) flipped kernel Wf."""
    return w[:, :, ::-1, ::-1].transpose(2, 3, 0, 1)


def _project_latent(z2d, w, scale, shift, act, k):
    """ConvTranspose2d on a 1x1 input == z @ W (outer product over (ky,kx,co))."""
    Cin, Cout = w.shape[0], w.shape[1]
    wm = w.transpose(0, 2, 3, 1).reshape(Cin, k * k * Cout)  # cols = (ky, kx, co)
    scale_cols = jnp.tile(scale, k * k)
    shift_cols = jnp.tile(shift, k * k)
    out = fused_matmul(z2d, wm, scale_cols, shift_cols, act)  # (B, k*k*Cout)
    return out.reshape(z2d.shape[0], k, k, Cout)              # NHWC


def _conv_transpose_s1(x, w, scale, shift, pad, k, act):
    """Stride-1 transposed conv: pad by k-1-pad (crop if negative), flipped-kernel
    correlation via im2col + fused matmul."""
    B, H, W, C = x.shape
    Cout = w.shape[1]
    q = k - 1 - pad
    if q >= 0:
        xp = jnp.pad(x, ((0, 0), (q, q), (q, q), (0, 0)))
    else:
        c = -q
        xp = x[:, c:H - c, c:W - c, :]
    patches, (_, Ho, Wo) = _im2col_nhwc(xp, k)
    wm = _flipped_weight(w).reshape(k * k * C, Cout)
    out = fused_matmul(patches, wm, scale, shift, act)
    return out.reshape(B, Ho, Wo, Cout)


def _phase_slab(x, d_y, d_x, Hm, Wm, ks):
    """Zero-padded / cropped input window needed by one sub-pixel phase."""
    B, H, W, C = x.shape
    need_h, need_w = Hm + ks - 1, Wm + ks - 1
    pl_y, pr_y = max(0, -d_y), max(0, d_y + need_h - H)
    pl_x, pr_x = max(0, -d_x), max(0, d_x + need_w - W)
    xp = jnp.pad(x, ((0, 0), (pl_y, pr_y), (pl_x, pr_x), (0, 0)))
    sy, sx = d_y + pl_y, d_x + pl_x
    return xp[:, sy:sy + need_h, sx:sx + need_w, :]


def _conv_transpose_s2(x, w, scale, shift, pad, k, act):
    """Stride-2 transposed conv via sub-pixel decomposition: 4 phase convs with
    (k/2 x k/2) kernels on the undilated input — no multiplies against zeros."""
    s = 2
    B, H, W, C = x.shape
    Cout = w.shape[1]
    q = k - 1 - pad
    Ho = (H - 1) * s - 2 * pad + k
    Wo = (W - 1) * s - 2 * pad + k
    assert k % s == 0 and Ho % s == 0 and Wo % s == 0
    ks = k // s
    Hm, Wm = Ho // s, Wo // s
    w_f = _flipped_weight(w)                             # (k, k, Cin, Cout)

    y = jnp.zeros((B, Ho, Wo, Cout), jnp.float32)
    for ey in range(s):
        for ex in range(s):
            te_y, te_x = (q - ey) % s, (q - ex) % s
            d_y, d_x = (ey + te_y - q) // s, (ex + te_x - q) // s
            slab = _phase_slab(x, d_y, d_x, Hm, Wm, ks)
            patches, _ = _im2col_nhwc(slab, ks)          # (B*Hm*Wm, ks*ks*C)
            w_ph = w_f[te_y::s, te_x::s].reshape(ks * ks * C, Cout)
            out = fused_matmul(patches, w_ph, scale, shift, act)
            y = y.at[:, ey::s, ex::s, :].set(out.reshape(B, Hm, Wm, Cout))
    return y


# ---------------------------------------------------------------------------
# GenModel (img_len = 28 branch), deterministic synthetic parameters
# ---------------------------------------------------------------------------
def init_gen_params(key, latent_dim, inner_dim, num_chan):
    # (Cin, Cout, kernel, stride, pad, has_batchnorm)
    layer_cfg = [
        (latent_dim,     inner_dim * 16, 4, 1, 0, True),
        (inner_dim * 16, inner_dim * 8,  4, 2, 1, True),
        (inner_dim * 8,  inner_dim * 4,  4, 2, 1, True),
        (inner_dim * 4,  inner_dim * 2,  4, 1, 1, True),
        (inner_dim * 2,  inner_dim * 1,  4, 1, 1, True),
        (inner_dim * 1,  num_chan,       4, 2, 5, False),  # pad = int(0.5*(38-28))
    ]
    eps = 1e-5
    params = []
    for (cin, cout, k, s, p, has_bn) in layer_cfg:
        key, kw_, kg, kb, km, kv, kbias = jax.random.split(key, 7)
        w = 0.05 * jax.random.normal(kw_, (cin, cout, k, k), jnp.float32)
        if has_bn:
            gamma = 1.0 + 0.1 * jax.random.normal(kg, (cout,), jnp.float32)
            beta = 0.1 * jax.random.normal(kb, (cout,), jnp.float32)
            rmean = 0.1 * jax.random.normal(km, (cout,), jnp.float32)
            rvar = 1.0 + 0.1 * jax.random.uniform(kv, (cout,), jnp.float32)
            scale = gamma / jnp.sqrt(rvar + eps)   # eval-mode BatchNorm, folded
            shift = beta - rmean * scale
            act = "leaky"
        else:
            bias = 0.1 * jax.random.normal(kbias, (cout,), jnp.float32)
            scale = jnp.ones((cout,), jnp.float32)
            shift = bias
            act = "tanh_out"
        params.append(dict(w=w, scale=scale, shift=shift,
                           k=k, stride=s, pad=p, act=act))
    return params


def gen_model_forward(z, params):
    """z: (B, latent_dim, 1, 1) NCHW  ->  (B, num_chan, 28, 28) in [0, 1]."""
    B = z.shape[0]
    x = z.reshape(B, -1).astype(jnp.float32)             # (B, latent)
    lp0 = params[0]
    x = _project_latent(x, lp0["w"], lp0["scale"], lp0["shift"],
                        lp0["act"], lp0["k"])            # (B, 4, 4, C1) NHWC
    for lp in params[1:]:
        if lp["stride"] == 1:
            x = _conv_transpose_s1(x, lp["w"], lp["scale"], lp["shift"],
                                   lp["pad"], lp["k"], lp["act"])
        else:
            x = _conv_transpose_s2(x, lp["w"], lp["scale"], lp["shift"],
                                   lp["pad"], lp["k"], lp["act"])
    # The trailing 0.5 * tanh(.) + 0.5 is fused into the last kernel ("tanh_out").
    return x.transpose(0, 3, 1, 2)                       # back to NCHW


# TODO(synk): train-mode BatchNorm (batch statistics + running-stat updates) is
# not implemented; inference-mode (folded running stats) semantics are used.


# ---------------------------------------------------------------------------
# Pure-JAX reference (dense dilate+pad im2col formulation, f32) for validation
# ---------------------------------------------------------------------------
def _reference_forward(z, params):
    x = z.astype(jnp.float32)
    for lp in params:
        w, k, s, p = lp["w"], lp["k"], lp["stride"], lp["pad"]
        B, C, H, W = x.shape
        if s > 1:
            Hd, Wd = (H - 1) * s + 1, (W - 1) * s + 1
            x = jnp.zeros((B, C, Hd, Wd), x.dtype).at[:, :, ::s, ::s].set(x)
        q = k - 1 - p
        if q >= 0:
            x = jnp.pad(x, ((0, 0), (0, 0), (q, q), (q, q)))
        else:
            c = -q
            x = x[:, :, c:x.shape[2] - c, c:x.shape[3] - c]
        B, C, H, W = x.shape
        Ho, Wo = H - k + 1, W - k + 1
        cols = [x[:, :, ky:ky + Ho, kx:kx + Wo]
                for ky in range(k) for kx in range(k)]
        pat = jnp.stack(cols, axis=2).transpose(0, 3, 4, 1, 2)
        pat = pat.reshape(B * Ho * Wo, C * k * k)
        wf = w[:, :, ::-1, ::-1].transpose(0, 2, 3, 1).reshape(C * k * k, -1)
        y = jnp.dot(pat, wf, precision=jax.lax.Precision.HIGHEST)
        y = y * lp["scale"][None, :] + lp["shift"][None, :]
        if lp["act"] == "leaky":
            y = jnp.where(y > 0, y, 0.2 * y)
        else:
            y = 0.5 * jnp.tanh(y) + 0.5
        Cout = wf.shape[1]
        x = y.reshape(B, Ho, Wo, Cout).transpose(0, 3, 1, 2)
    return x


if __name__ == "__main__":
    batch = 2
    latent_dim = 16     # small stand-in for 100
    inner_dim = 8       # small stand-in for 128
    num_chan = 1        # FashionMNIST
    img_len = 28

    key = jax.random.PRNGKey(0)
    kp, kz = jax.random.split(key)
    params = init_gen_params(kp, latent_dim, inner_dim, num_chan)
    z = jax.random.normal(kz, (batch, latent_dim, 1, 1), jnp.float32)

    out = jax.block_until_ready(gen_model_forward(z, params))

    assert out.shape == (batch, num_chan, img_len, img_len), out.shape
    assert bool(jnp.all(jnp.isfinite(out)))
    assert bool(jnp.all((out >= 0.0) & (out <= 1.0)))

    ref = jax.block_until_ready(_reference_forward(z, params))
    max_err = float(jnp.max(jnp.abs(out - ref)))
    assert max_err < 5e-2, max_err

    print("KERNEL_OK")
</pallas_src>

<mosaic_0001>
module attributes {stable_mosaic.version = 11 : i64} {
  func.func @_matmul_affine_act_kernel(%arg0: i32, %arg1: i32, %arg2: i32, %arg3: memref<8x128xbf16, #tpu.memory_space<vmem>>, %arg4: memref<128x256xbf16, #tpu.memory_space<vmem>>, %arg5: memref<1x256xf32, #tpu.memory_space<vmem>>, %arg6: memref<1x256xf32, #tpu.memory_space<vmem>>, %arg7: memref<8x256xf32, #tpu.memory_space<vmem>>, %arg8: memref<8x256xf32, #tpu.memory_space<vmem>>) attributes {dimension_semantics = [#tpu.dimension_semantics<parallel>, #tpu.dimension_semantics<parallel>, #tpu.dimension_semantics<arbitrary>], iteration_bounds = array<i64: 1, 8, 1>, scalar_prefetch = 0 : i64, scratch_operands = 1 : i64, tpu.core_type = #tpu.core_type<tc>, window_params = [{transform_indices = @transform_0, window_bounds = array<i64: 8, 128>}, {transform_indices = @transform_1, window_bounds = array<i64: 128, 256>}, {transform_indices = @transform_2, window_bounds = array<i64: 1, 256>}, {transform_indices = @transform_3, window_bounds = array<i64: 1, 256>}, {transform_indices = @transform_4, window_bounds = array<i64: 8, 256>}]} {
    %c0_i32 = arith.constant 0 : i32
    %0 = arith.cmpi eq, %arg2, %c0_i32 : i32
    %1 = arith.extui %0 : i1 to i32
    %c0_i32_0 = arith.constant 0 : i32
    %2 = arith.cmpi ne, %1, %c0_i32_0 : i32
    scf.if %2 {
      %cst_10 = arith.constant 0.000000e+00 : f32
      %12 = vector.broadcast %cst_10 : f32 to vector<8x256xf32>
      %c0_11 = arith.constant 0 : index
      %c0_12 = arith.constant 0 : index
      %13 = vector.load %arg8[%c0_11, %c0_12] : memref<8x256xf32, #tpu.memory_space<vmem>>, vector<8x256xf32>
      tpu.vector_store %arg8[%c0_11, %c0_12], %12 {strides = array<i32>} : memref<8x256xf32, #tpu.memory_space<vmem>>, vector<8x256xf32>,
    } else {
    }
    %c0 = arith.constant 0 : index
    %c0_1 = arith.constant 0 : index
    %3 = vector.load %arg8[%c0, %c0_1] : memref<8x256xf32, #tpu.memory_space<vmem>>, vector<8x256xf32>
    %c0_2 = arith.constant 0 : index
    %c0_3 = arith.constant 0 : index
    %4 = vector.load %arg3[%c0_2, %c0_3] : memref<8x128xbf16, #tpu.memory_space<vmem>>, vector<8x128xbf16>
    %c0_4 = arith.constant 0 : index
    %c0_5 = arith.constant 0 : index
    %5 = vector.load %arg4[%c0_4, %c0_5] : memref<128x256xbf16, #tpu.memory_space<vmem>>, vector<128x256xbf16>
    %cst = arith.constant dense<0.000000e+00> : vector<8x256xf32>
    %6 = tpu.matmul %4, %5, %cst {dimension_numbers = #tpu.dot_dimension_numbers<[1], [0], [0], [1], [0, 0, 1, 1], [], []>} : vector<8x128xbf16>, vector<128x256xbf16>, vector<8x256xf32> -> vector<8x256xf32>
    %7 = arith.addf %3, %6 : vector<8x256xf32>
    %c0_6 = arith.constant 0 : index
    %c0_7 = arith.constant 0 : index
    %8 = vector.load %arg8[%c0_6, %c0_7] : memref<8x256xf32, #tpu.memory_space<vmem>>, vector<8x256xf32>
    tpu.vector_store %arg8[%c0_6, %c0_7], %7 {strides = array<i32>} : memref<8x256xf32, #tpu.memory_space<vmem>>, vector<8x256xf32>,
    %c0_i32_8 = arith.constant 0 : i32
    %9 = arith.cmpi eq, %arg2, %c0_i32_8 : i32
    %10 = arith.extui %9 : i1 to i32
    %c0_i32_9 = arith.constant 0 : i32
    %11 = arith.cmpi ne, %10, %c0_i32_9 : i32
    scf.if %11 {
      %c0_10 = arith.constant 0 : index
      %c0_11 = arith.constant 0 : index
      %12 = vector.load %arg8[%c0_10, %c0_11] : memref<8x256xf32, #tpu.memory_space<vmem>>, vector<8x256xf32>
      %c0_12 = arith.constant 0 : index
      %c0_13 = arith.constant 0 : index
      %13 = vector.load %arg5[%c0_12, %c0_13] : memref<1x256xf32, #tpu.memory_space<vmem>>, vector<1x256xf32>
      %14 = vector.broadcast %13 : vector<1x256xf32> to vector<8x256xf32>
      %15 = arith.mulf %12, %14 : vector<8x256xf32>
      %c0_14 = arith.constant 0 : index
      %c0_15 = arith.constant 0 : index
      %16 = vector.load %arg6[%c0_14, %c0_15] : memref<1x256xf32, #tpu.memory_space<vmem>>, vector<1x256xf32>
      %17 = vector.broadcast %16 : vector<1x256xf32> to vector<8x256xf32>
      %18 = arith.addf %15, %17 : vector<8x256xf32>
      %cst_16 = arith.constant 0.000000e+00 : f32
      %19 = vector.broadcast %cst_16 : f32 to vector<8x256xf32>
      %20 = arith.cmpf ogt, %18, %19 : vector<8x256xf32>
      %cst_17 = arith.constant 2.000000e-01 : f32
      %21 = vector.broadcast %cst_17 : f32 to vector<8x256xf32>
      %22 = arith.mulf %21, %18 : vector<8x256xf32>
      %23 = arith.select %20, %18, %22 : vector<8x256xi1>, vector<8x256xf32>
      %c0_18 = arith.constant 0 : index
      %c0_19 = arith.constant 0 : index
      %24 = vector.load %arg7[%c0_18, %c0_19] : memref<8x256xf32, #tpu.memory_space<vmem>>, vector<8x256xf32>
      tpu.vector_store %arg7[%c0_18, %c0_19], %23 {strides = array<i32>} : memref<8x256xf32, #tpu.memory_space<vmem>>, vector<8x256xf32>,
    } else {
    }
    return
  }
  func.func @transform_0(%arg0: i32, %arg1: i32, %arg2: i32) -> (i32, i32) {
    %c0_i32 = arith.constant 0 : i32
    return %arg0, %arg2 : i32, i32
  }
  func.func @transform_1(%arg0: i32, %arg1: i32, %arg2: i32) -> (i32, i32) {
    %c0_i32 = arith.constant 0 : i32
    return %arg2, %arg1 : i32, i32
  }
  func.func @transform_2(%arg0: i32, %arg1: i32, %arg2: i32) -> (i32, i32) {
    %c0_i32 = arith.constant 0 : i32
    %c0_i32_0 = arith.constant 0 : i32
    return %c0_i32, %arg1 : i32, i32
  }
  func.func @transform_3(%arg0: i32, %arg1: i32, %arg2: i32) -> (i32, i32) {
    %c0_i32 = arith.constant 0 : i32
    %c0_i32_0 = arith.constant 0 : i32
    return %c0_i32, %arg1 : i32, i32
  }
  func.func @transform_4(%arg0: i32, %arg1: i32, %arg2: i32) -> (i32, i32) {
    %c0_i32 = arith.constant 0 : i32
    return %arg0, %arg1 : i32, i32
  }
}

</mosaic_0001>

<llo_original>
// kernel: tpu_custom_call.1
$region0: #{tpu_custom_call.1}
  #allocation0 [shape = 'u32[]', space=smem, size = 0x4, offset = 0x4, fixed_abs, tag = 'smem constant byte address 0x4 - core index']
  #allocation1 [shape = 'u32[144,128]{1,0:T(1,128)}', space=vmem, size = 0x12000, scoped, tag = 'internal scratch']
  #allocation2 [shape = 'f32[8,256]{1,0:T(8,128)}', space=vmem, size = 0x2000, scoped, tag = 'scratch operand']
  %s0 = inlined_call_operand.hbm [shape: bf16[8,128], index: 0, kind: input, shape index: {}]
  %s1 = inlined_call_operand.hbm [shape: bf16[128,2048], index: 1, kind: input, shape index: {}]
  %s2 = inlined_call_operand.hbm [shape: f32[1,2048], index: 2, kind: input, shape index: {}]
  %s3 = inlined_call_operand.hbm [shape: f32[1,2048], index: 3, kind: input, shape index: {}]
  %s4 = inlined_call_operand.hbm [shape: f32[8,2048], index: 4, kind: output, shape index: {}]
  %s5 = sld [smem:[#allocation0]]
  $region73: #{tpu_custom_call.1} parent=0
    _
  %s7 = ssub.s32 1, %s5
  %s8 = scalar_select 0, %s7, %s5
  $region1: #{tpu_custom_call.1} parent=0
    #allocation3 [shape = 'u8[2048]{0}', space=vmem, size = 0x800, scoped, tag = 'input window, operand 0, single buffered']
    #allocation4 [shape = 's32[2]{0}', space=sflag, size = 0x8, scoped, tag = 'scoped memory for tpu_custom_call.1']
    #allocation5 [shape = 's32[2]{0}', space=sflag, size = 0x8, scoped, tag = 'scoped memory for tpu_custom_call.1']
    #allocation6 [shape = 'u8[131072]{0}', space=vmem, size = 0x20000, scoped, tag = 'input window, operand 1']
    #allocation7 [shape = 's32[2]{0}', space=sflag, size = 0x8, scoped, tag = 'scoped memory for tpu_custom_call.1']
    #allocation8 [shape = 'u8[2048]{0}', space=vmem, size = 0x800, scoped, tag = 'input window, operand 2']
    #allocation9 [shape = 'u8[2048]{0}', space=vmem, size = 0x800, scoped, tag = 'input window, operand 3']
    #allocation10 [shape = 's32[2]{0}', space=sflag, size = 0x8, scoped, tag = 'scoped memory for tpu_custom_call.1']
    #allocation11 [shape = 'u8[16384]{0}', space=vmem, size = 0x4000, scoped, tag = 'output window, operand 0']
    %9 = vsyncpa [#allocation4], 0
    %10 = vsyncpa [#allocation7], 0
    %s11 = scalar_lea.sflag [#allocation7], 1
    %12 = vsyncpa %s11, 0
    %13 = vsyncpa [#allocation10], 0
    %s14 = scalar_lea.sflag [#allocation10], 1
    %15 = vsyncpa %s14, 0
    %16 = vsyncpa [#allocation5], 0
    %s17 = scalar_lea.sflag [#allocation5], 1
    %18 = vsyncpa %s17, 0
    loop: start=0, step=1, limit=10
    $region2: #{tpu_custom_call.1} parent=1 // loop_pre_header
      _
    $region3: #{tpu_custom_call.1} parent=1 // loop_header
      %s20 = sphi 0, %s24
      %p21 = scmp.ge.s32.totalorder %s20, 10
      %s27 = sphi 0, %s46
      %s28 = sphi 0, %s42
      %s29 = sphi 0, %s38
      %s30 = sphi 0, %s27
      %s31 = sphi 0, %s28
      %s32 = sphi 0, %s29
      %s33 = sphi 0, %s30
      %s34 = sphi 0, %s31
      %s35 = sphi 0, %s32
      %s51 = sphi 0, %s53
      %s54 = sphi 0, %s51
      %s55 = sphi 0, %s54
      %s71 = sphi 0, %s55
      %s79 = sphi 0, %s81
      %s82 = sphi 0, %s79
      %s83 = sphi 0, %s82
      %s99 = sphi 0, %s83
      %s105 = sphi 0, %s107
      %s108 = sphi 0, %s105
      %s109 = sphi 0, %s108
      %s125 = sphi 0, %s109
      %s131 = sphi 0, %s133
      %s134 = sphi 0, %s131
      %s135 = sphi 0, %s134
      %s151 = sphi 0, %s135
      %s159 = sphi 0, %s161
      %s162 = sphi 0, %s159
      %s163 = sphi 0, %s162
      %s179 = sphi 0, %s163
    $region4: #{tpu_custom_call.1} parent=1 // loop_header_branch
      %23 = sbr.rel (%p21) target = $region8
    $region5: #{tpu_custom_call.1} parent=1 // loop_body
      %s25 = ssub.s32 %s20, 1
      %s26 = ssub.s32 %s20, 2
      %s36 = sadd.s32 1, %s29
      %p37 = scmp.ge.s32.totalorder %s36, 1
      %s38 = scalar_select %p37, 0, %s36
      %s39 = sadd.s32 1, %s28
      %s40 = scalar_select %p37, %s39, %s28
      %p41 = scmp.ge.s32.totalorder %s40, 8
      %s42 = scalar_select %p41, 0, %s40
      %s43 = sadd.s32 1, %s27
      %s44 = scalar_select %p41, %s43, %s27
      %p45 = scmp.ge.s32.totalorder %s44, 1
      %s46 = scalar_select %p45, 0, %s44
      %s47 = ssub.s32 %s27, %s46
      %s48 = ssub.s32 %s29, %s38
      %s49 = sor.u32 %s47, %s48
      %p50 = scmp.eq.s32.totalorder %s49, 0
      %s52 = sadd.s32 %s51, 1
      %s53 = scalar_select %p50, %s51, %s52
      %p56 = pneg %p50
      %p57 = scmp.eq.s32.totalorder %s20, 7
      %p58 = por %p56, %p57
      %p59 = scmp.ne.s32.totalorder %s51, %s54
      %p60 = scmp.eq.s32.totalorder %s20, 0
      %p61 = por %p59, %p60
      %p62 = scmp.ne.s32.totalorder %s51, %s54
      %p63 = scmp.eq.s32.totalorder %s25, 7
      %p64 = por %p62, %p63
      %p65 = scmp.ne.s32.totalorder %s54, %s55
      %p66 = scmp.eq.s32.totalorder %s25, 0
      %p67 = por %p65, %p66
      %p68 = scmp.ne.s32.totalorder %s54, %s55
      %p69 = scmp.eq.s32.totalorder %s26, 7
      %p70 = por %p68, %p69
      %p72 = scmp.ne.s32.totalorder %s55, %s71
      %p73 = scmp.eq.s32.totalorder %s26, 0
      %p74 = por %p72, %p73
      %s75 = ssub.s32 %s29, %s38
      %s76 = ssub.s32 %s28, %s42
      %s77 = sor.u32 %s75, %s76
      %p78 = scmp.eq.s32.totalorder %s77, 0
      %s80 = sadd.s32 %s79, 1
      %s81 = scalar_select %p78, %s79, %s80
      %p84 = pneg %p78
      %p85 = scmp.eq.s32.totalorder %s20, 7
      %p86 = por %p84, %p85
      %p87 = scmp.ne.s32.totalorder %s79, %s82
      %p88 = scmp.eq.s32.totalorder %s20, 0
      %p89 = por %p87, %p88
      %p90 = scmp.ne.s32.totalorder %s79, %s82
      %p91 = scmp.eq.s32.totalorder %s25, 7
      %p92 = por %p90, %p91
      %p93 = scmp.ne.s32.totalorder %s82, %s83
      %p94 = scmp.eq.s32.totalorder %s25, 0
      %p95 = por %p93, %p94
      %p96 = scmp.ne.s32.totalorder %s82, %s83
      %p97 = scmp.eq.s32.totalorder %s26, 7
      %p98 = por %p96, %p97
      %p100 = scmp.ne.s32.totalorder %s83, %s99
      %p101 = scmp.eq.s32.totalorder %s26, 0
      %p102 = por %p100, %p101
      %s103 = ssub.s32 %s28, %s42
      %p104 = scmp.eq.s32.totalorder %s103, 0
      %s106 = sadd.s32 %s105, 1
      %s107 = scalar_select %p104, %s105, %s106
      %p110 = pneg %p104
      %p111 = scmp.eq.s32.totalorder %s20, 7
      %p112 = por %p110, %p111
      %p113 = scmp.ne.s32.totalorder %s105, %s108
      %p114 = scmp.eq.s32.totalorder %s20, 0
      %p115 = por %p113, %p114
      %p116 = scmp.ne.s32.totalorder %s105, %s108
      %p117 = scmp.eq.s32.totalorder %s25, 7
      %p118 = por %p116, %p117
      %p119 = scmp.ne.s32.totalorder %s108, %s109
      %p120 = scmp.eq.s32.totalorder %s25, 0
      %p121 = por %p119, %p120
      %p122 = scmp.ne.s32.totalorder %s108, %s109
      %p123 = scmp.eq.s32.totalorder %s26, 7
      %p124 = por %p122, %p123
      %p126 = scmp.ne.s32.totalorder %s109, %s125
      %p127 = scmp.eq.s32.totalorder %s26, 0
      %p128 = por %p126, %p127
      %s129 = ssub.s32 %s28, %s42
      %p130 = scmp.eq.s32.totalorder %s129, 0
      %s132 = sadd.s32 %s131, 1
      %s133 = scalar_select %p130, %s131, %s132
      %p136 = pneg %p130
      %p137 = scmp.eq.s32.totalorder %s20, 7
      %p138 = por %p136, %p137
      %p139 = scmp.ne.s32.totalorder %s131, %s134
      %p140 = scmp.eq.s32.totalorder %s20, 0
      %p141 = por %p139, %p140
      %p142 = scmp.ne.s32.totalorder %s131, %s134
      %p143 = scmp.eq.s32.totalorder %s25, 7
      %p144 = por %p142, %p143
      %p145 = scmp.ne.s32.totalorder %s134, %s135
      %p146 = scmp.eq.s32.totalorder %s25, 0
      %p147 = por %p145, %p146
      %p148 = scmp.ne.s32.totalorder %s134, %s135
      %p149 = scmp.eq.s32.totalorder %s26, 7
      %p150 = por %p148, %p149
      %p152 = scmp.ne.s32.totalorder %s135, %s151
      %p153 = scmp.eq.s32.totalorder %s26, 0
      %p154 = por %p152, %p153
      %s155 = ssub.s32 %s27, %s46
      %s156 = ssub.s32 %s28, %s42
      %s157 = sor.u32 %s155, %s156
      %p158 = scmp.eq.s32.totalorder %s157, 0
      %s160 = sadd.s32 %s159, 1
      %s161 = scalar_select %p158, %s159, %s160
      %p164 = pneg %p158
      %p165 = scmp.eq.s32.totalorder %s20, 7
      %p166 = por %p164, %p165
      %p167 = scmp.ne.s32.totalorder %s159, %s162
      %p168 = scmp.eq.s32.totalorder %s20, 0
      %p169 = por %p167, %p168
      %p170 = scmp.ne.s32.totalorder %s159, %s162
      %p171 = scmp.eq.s32.totalorder %s25, 7
      %p172 = por %p170, %p171
      %p173 = scmp.ne.s32.totalorder %s162, %s163
      %p174 = scmp.eq.s32.totalorder %s25, 0
      %p175 = por %p173, %p174
      %p176 = scmp.ne.s32.totalorder %s162, %s163
      %p177 = scmp.eq.s32.totalorder %s26, 7
      %p178 = por %p176, %p177
      %p180 = scmp.ne.s32.totalorder %s163, %s179
      %p181 = scmp.eq.s32.totalorder %s26, 0
      %p182 = por %p180, %p181
      %p183 = scmp.le.s32.totalorder 1, %s20
      %p184 = scmp.lt.s32.totalorder %s20, 9
      %p185 = pnand %p183, %p184
      %p186 = pneg %p185
      // Predicated region
      $region9: #{tpu_custom_call.1} parent=5 // pred_check
        _
      $region10: #{tpu_custom_call.1} parent=5 // pred_check_branch
        %188 = sbr.rel (%p185) target = $region12
      $region11: #{tpu_custom_call.1} parent=5 // pred_region
        %s189 = ssub.s32 %s20, 1
        // Predicated region
        $region13: #{tpu_custom_call.1} parent=11 // pred_check
          %p190 = pneg %p67
        $region14: #{tpu_custom_call.1} parent=11 // pred_check_branch
          %192 = sbr.rel (%p190) target = $region16
        $region15: #{tpu_custom_call.1} parent=11 // pred_region
          %s194 = ssub.s32 64, 64
          %195 = vsyncadd [#allocation4], %s194
          %s196 = sadd.s32 %s32, %s30
          %s197 = smul.addr %s196, 64
          %s198 = scalar_lea.hbm %s0, %s197
          %s200 = sshll.u32 [#allocation3], 4
          %s201 = int_to_ptr.vmem [resolvable:$true] %s200
          %203 = dma.hbm_to_vmem [thread:$0]  %s198, 64, %s201, [#allocation4]
        $region16: #{tpu_custom_call.1} parent=11 // pred_fallthru
          _
      $region12: #{tpu_custom_call.1} parent=5 // pred_fallthru
        _
      %p204 = scmp.lt.s32.totalorder %s20, 8
      // Predicated region
      $region17: #{tpu_custom_call.1} parent=5 // pred_check
        %p205 = pneg %p204
      $region18: #{tpu_custom_call.1} parent=5 // pred_check_branch
        %207 = sbr.rel (%p205) target = $region20
      $region19: #{tpu_custom_call.1} parent=5 // pred_region
        // Predicated region
        $region21: #{tpu_custom_call.1} parent=19 // pred_check
          %p208 = pneg %p89
        $region22: #{tpu_custom_call.1} parent=19 // pred_check_branch
          %210 = sbr.rel (%p208) target = $region24
        $region23: #{tpu_custom_call.1} parent=19 // pred_region
          %s211 = sand.u32 %s20, 1
          %s212 = scalar_lea.sflag [#allocation7], %s211
          %s213 = sand.u32 %s79, 1
          %s214 = smul.addr %s213, 128
          %s215 = scalar_lea.vmem [#allocation6], %s214
          %s216 = smul.u32 16, %s29
          %s217 = smul.u32 2, %s28
          %s219 = ssub.s32 2048, 2048
          %220 = vsyncadd %s212, %s219
          %s221 = smul.addr %s216, 16
          %s222 = sadd.s32 %s217, %s221
          %s223 = smul.addr %s222, 64
          %s224 = scalar_lea.hbm %s1, %s223
          %s225 = sshll.u32 %s215, 4
          %s226 = int_to_ptr.vmem [resolvable:$true] %s225
          %231 = dma.hbm_to_vmem [thread:$0]  %s224, 2048, %s226, %s212, 1024, 128, 8
        $region24: #{tpu_custom_call.1} parent=19 // pred_fallthru
          _
        // Predicated region
        $region25: #{tpu_custom_call.1} parent=19 // pred_check
          %p232 = pneg %p115
        $region26: #{tpu_custom_call.1} parent=19 // pred_check_branch
          %234 = sbr.rel (%p232) target = $region28
        $region27: #{tpu_custom_call.1} parent=19 // pred_region
          %s235 = sand.u32 %s20, 1
          %s236 = scalar_lea.sflag [#allocation7], %s235
          %s237 = sand.u32 %s105, 1
          %s238 = smul.addr %s237, 2
          %s239 = scalar_lea.vmem [#allocation8], %s238
          %s240 = smul.u32 2, %s28
          %s242 = ssub.s32 32, 32
          %243 = vsyncadd %s236, %s242
          %s244 = smul.addr %s240, 16
          %s245 = scalar_lea.hbm %s2, %s244
          %s247 = sshll.u32 %s239, 4
          %s248 = int_to_ptr.vmem [resolvable:$true] %s247
          %250 = dma.hbm_to_vmem [thread:$0]  %s245, 32, %s248, %s236
        $region28: #{tpu_custom_call.1} parent=19 // pred_fallthru
          _
        // Predicated region
        $region29: #{tpu_custom_call.1} parent=19 // pred_check
          %p251 = pneg %p141
        $region30: #{tpu_custom_call.1} parent=19 // pred_check_branch
          %253 = sbr.rel (%p251) target = $region32
        $region31: #{tpu_custom_call.1} parent=19 // pred_region
          %s254 = sand.u32 %s131, 1
          %s255 = scalar_lea.sflag [#allocation10], %s254
          %s256 = sand.u32 %s131, 1
          %s257 = smul.addr %s256, 2
          %s258 = scalar_lea.vmem [#allocation9], %s257
          %s259 = smul.u32 2, %s28
          %s261 = ssub.s32 32, 32
          %262 = vsyncadd %s255, %s261
          %s263 = smul.addr %s259, 16
          %s264 = scalar_lea.hbm %s3, %s263
          %s266 = sshll.u32 %s258, 4
          %s267 = int_to_ptr.vmem [resolvable:$true] %s266
          %269 = dma.hbm_to_vmem [thread:$0]  %s264, 32, %s267, %s255
        $region32: #{tpu_custom_call.1} parent=19 // pred_fallthru
          _
      $region20: #{tpu_custom_call.1} parent=5 // pred_fallthru
        _
      %p270 = scmp.le.s32.totalorder 1, %s20
      %p271 = scmp.lt.s32.totalorder %s20, 9
      %p272 = pnand %p270, %p271
      %p273 = pneg %p272
      // Predicated region
      $region33: #{tpu_custom_call.1} parent=5 // pred_check
        _
      $region34: #{tpu_custom_call.1} parent=5 // pred_check_branch
        %275 = sbr.rel (%p272) target = $region36
      $region35: #{tpu_custom_call.1} parent=5 // pred_region
        %s276 = ssub.s32 %s20, 1
        // Predicated region
        $region37: #{tpu_custom_call.1} parent=35 // pred_check
          %p277 = pneg %p67
        $region38: #{tpu_custom_call.1} parent=35 // pred_check_branch
          %279 = sbr.rel (%p277) target = $region40
        $region39: #{tpu_custom_call.1} parent=35 // pred_region
          %280 = dma.done [#allocation4], 64
        $region40: #{tpu_custom_call.1} parent=35 // pred_fallthru
          _
        %s281 = sand.u32 %s25, 1
        %s282 = scalar_lea.sflag [#allocation7], %s281
        %s283 = sand.u32 %s82, 1
        %s284 = smul.addr %s283, 128
        %s285 = scalar_lea.vmem [#allocation6], %s284
        // Predicated region
        $region41: #{tpu_custom_call.1} parent=35 // pred_check
          %p286 = pneg %p95
        $region42: #{tpu_custom_call.1} parent=35 // pred_check_branch
          %288 = sbr.rel (%p286) target = $region44
        $region43: #{tpu_custom_call.1} parent=35 // pred_region
          %289 = dma.done %s282, 2048
        $region44: #{tpu_custom_call.1} parent=35 // pred_fallthru
          _
        %s290 = sand.u32 %s25, 1
        %s291 = scalar_lea.sflag [#allocation7], %s290
        %s292 = sand.u32 %s108, 1
        %s293 = smul.addr %s292, 2
        %s294 = scalar_lea.vmem [#allocation8], %s293
        // Predicated region
        $region45: #{tpu_custom_call.1} parent=35 // pred_check
          %p295 = pneg %p121
        $region46: #{tpu_custom_call.1} parent=35 // pred_check_branch
          %297 = sbr.rel (%p295) target = $region48
        $region47: #{tpu_custom_call.1} parent=35 // pred_region
          %298 = dma.done %s291, 32
        $region48: #{tpu_custom_call.1} parent=35 // pred_fallthru
          _
        %s299 = sand.u32 %s134, 1
        %s300 = scalar_lea.sflag [#allocation10], %s299
        %s301 = sand.u32 %s134, 1
        %s302 = smul.addr %s301, 2
        %s303 = scalar_lea.vmem [#allocation9], %s302
        // Predicated region
        $region49: #{tpu_custom_call.1} parent=35 // pred_check
          %p304 = pneg %p147
        $region50: #{tpu_custom_call.1} parent=35 // pred_check_branch
          %306 = sbr.rel (%p304) target = $region52
        $region51: #{tpu_custom_call.1} parent=35 // pred_region
          %307 = dma.done %s300, 32
        $region52: #{tpu_custom_call.1} parent=35 // pred_fallthru
          _
        %p308 = pneg %p67
        %p309 = pneg %p64
        %s310 = sand.u32 %s25, 1
        %s311 = scalar_lea.sflag [#allocation7], %s310
        %s312 = sand.u32 %s82, 1
        %s313 = smul.addr %s312, 128
        %s314 = scalar_lea.vmem [#allocation6], %s313
        %p315 = pneg %p95
        %p316 = pneg %p92
        %s317 = sand.u32 %s25, 1
        %s318 = scalar_lea.sflag [#allocation7], %s317
        %s319 = sand.u32 %s108, 1
        %s320 = smul.addr %s319, 2
        %s321 = scalar_lea.vmem [#allocation8], %s320
        %p322 = pneg %p121
        %p323 = pneg %p118
        %s324 = sand.u32 %s134, 1
        %s325 = scalar_lea.sflag [#allocation10], %s324
        %s326 = sand.u32 %s134, 1
        %s327 = smul.addr %s326, 2
        %s328 = scalar_lea.vmem [#allocation9], %s327
        %p329 = pneg %p147
        %p330 = pneg %p144
        %p331 = pneg %p175
        %p332 = pneg %p172
        %s333 = sand.u32 %s162, 1
        %s334 = scalar_lea.sflag [#allocation5], %s333
        %s335 = sand.u32 %s162, 1
        %s336 = smul.addr %s335, 16
        %s337 = scalar_lea.vmem [#allocation11], %s336
        %s338 = smul.u32 16, %s32
        %s339 = smul.u32 2, %s31
        %s340 = smul.u32 2, %s31
        %s341 = smul.u32 2, %s31
        %s342 = smul.u32 2, %s31
        %p344 = scmp.eq.s32.totalorder %s32, 0
        // Predicated region
        $region53: #{tpu_custom_call.1} parent=35 // pred_check
          %p345 = pneg %p344
        $region54: #{tpu_custom_call.1} parent=35 // pred_check_branch
          %347 = sbr.rel (%p345) target = $region56
        $region55: #{tpu_custom_call.1} parent=35 // pred_region
          %348 = vst [vmem:[#allocation2] sm:$0xff] 0.0
          %349 = vst [vmem:[#allocation2 + $0x8] sm:$0xff] 0.0
        $region56: #{tpu_custom_call.1} parent=35 // pred_fallthru
          _
        %v350 = vld [vmem:[#allocation2] sm:$0xff]
        %v351 = vld [vmem:[#allocation2 + $0x8] sm:$0xff]
        %v352 = vld [vmem:[#allocation3] sm:$0xf]
        %v353 = vld [vmem:[%s285] sm:$0xff]
        %v354 = vld [vmem:[%s285 + $0x8] sm:$0xff]
        %v355 = vld [vmem:[%s285 + $0x10] sm:$0xff]
        %v356 = vld [vmem:[%s285 + $0x18] sm:$0xff]
        %v357 = vld [vmem:[%s285 + $0x20] sm:$0xff]
        %v358 = vld [vmem:[%s285 + $0x28] sm:$0xff]
        %v359 = vld [vmem:[%s285 + $0x30] sm:$0xff]
        %v360 = vld [vmem:[%s285 + $0x38] sm:$0xff]
        %v361 = vld [vmem:[%s285 + $0x40] sm:$0xff]
        %v362 = vld [vmem:[%s285 + $0x48] sm:$0xff]
        %v363 = vld [vmem:[%s285 + $0x50] sm:$0xff]
        %v364 = vld [vmem:[%s285 + $0x58] sm:$0xff]
        %v365 = vld [vmem:[%s285 + $0x60] sm:$0xff]
        %v366 = vld [vmem:[%s285 + $0x68] sm:$0xff]
        %v367 = vld [vmem:[%s285 + $0x70] sm:$0xff]
        %v368 = vld [vmem:[%s285 + $0x78] sm:$0xff]
        %v385 = vunpack.c.l.b16 %v353
        %v386 = vunpack.c.h.b16 %v353
        %v387 = vunpack.c.l.b16 %v354
        %v388 = vunpack.c.h.b16 %v354
        %v389 = vunpack.c.l.b16 %v355
        %v390 = vunpack.c.h.b16 %v355
        %v391 = vunpack.c.l.b16 %v356
        %v392 = vunpack.c.h.b16 %v356
        %v393 = vunpack.c.l.b16 %v357
        %v394 = vunpack.c.h.b16 %v357
        %v395 = vunpack.c.l.b16 %v358
        %v396 = vunpack.c.h.b16 %v358
        %v397 = vunpack.c.l.b16 %v359
        %v398 = vunpack.c.h.b16 %v359
        %v399 = vunpack.c.l.b16 %v360
        %v400 = vunpack.c.h.b16 %v360
        %v401 = vunpack.c.l.b16 %v361
        %v402 = vunpack.c.h.b16 %v361
        %v403 = vunpack.c.l.b16 %v362
        %v404 = vunpack.c.h.b16 %v362
        %v405 = vunpack.c.l.b16 %v363
        %v406 = vunpack.c.h.b16 %v363
        %v407 = vunpack.c.l.b16 %v364
        %v408 = vunpack.c.h.b16 %v364
        %v409 = vunpack.c.l.b16 %v365
        %v410 = vunpack.c.h.b16 %v365
        %v411 = vunpack.c.l.b16 %v366
        %v412 = vunpack.c.h.b16 %v366
        %v413 = vunpack.c.l.b16 %v367
        %v414 = vunpack.c.h.b16 %v367
        %v415 = vunpack.c.l.b16 %v368
        %v416 = vunpack.c.h.b16 %v368
        %v417 = vpack.c.b16 %v387, %v385
        %v418 = vpack.c.b16 %v388, %v386
        %v419 = vpack.c.b16 %v391, %v389
        %v420 = vpack.c.b16 %v392, %v390
        %v421 = vpack.c.b16 %v395, %v393
        %v422 = vpack.c.b16 %v396, %v394
        %v423 = vpack.c.b16 %v399, %v397
        %v424 = vpack.c.b16 %v400, %v398
        %v425 = vpack.c.b16 %v403, %v401
        %v426 = vpack.c.b16 %v404, %v402
        %v427 = vpack.c.b16 %v407, %v405
        %v428 = vpack.c.b16 %v408, %v406
        %v429 = vpack.c.b16 %v411, %v409
        %v430 = vpack.c.b16 %v412, %v410
        %v431 = vpack.c.b16 %v415, %v413
        %v432 = vpack.c.b16 %v416, %v414
        %449 = vmatprep.subr.bf16.mxu0 %v418
        %450 = vmatpush1.bf16.msra.mxu0 %v417
        %451 = vmatprep.subr.bf16.mxu0 %v420
        %452 = vmatpush1.bf16.msra.mxu0 %v419
        %453 = vmatprep.subr.bf16.mxu0 %v422
        %454 = vmatpush1.bf16.msra.mxu0 %v421
        %455 = vmatprep.subr.bf16.mxu0 %v424
        %456 = vmatpush1.bf16.msra.mxu0 %v423
        %457 = vmatprep.subr.bf16.mxu0 %v426
        %458 = vmatpush1.bf16.msra.mxu0 %v425
        %459 = vmatprep.subr.bf16.mxu0 %v428
        %460 = vmatpush1.bf16.msra.mxu0 %v427
        %461 = vmatprep.subr.bf16.mxu0 %v430
        %462 = vmatpush1.bf16.msra.mxu0 %v429
        %463 = vmatprep.subr.bf16.mxu0 %v432
        %464 = vmatpush1.bf16.msra.mxu0 %v431
        %465 = vmatprep.subr.bf16.mxu0 0
        %466 = vmatpush1.bf16.msra.mxu0 0
        %467 = vmatprep.subr.bf16.mxu0 0
        %468 = vmatpush1.bf16.msra.mxu0 0
        %469 = vmatprep.subr.bf16.mxu0 0
        %470 = vmatpush1.bf16.msra.mxu0 0
        %471 = vmatprep.subr.bf16.mxu0 0
        %472 = vmatpush1.bf16.msra.mxu0 0
        %473 = vmatprep.subr.bf16.mxu0 0
        %474 = vmatpush1.bf16.msra.mxu0 0
        %475 = vmatprep.subr.bf16.mxu0 0
        %476 = vmatpush1.bf16.msra.mxu0 0
        %477 = vmatprep.subr.bf16.mxu0 0
        %478 = vmatpush1.bf16.msra.mxu0 0
        %479 = vmatprep.subr.bf16.mxu0 0
        %480 = vmatpush1.bf16.msra.mxu0 0
        %481 = vmatprep.mubr.bf16.mxu0 0
        %482 = vmatmul.mubr.bf16.gmra.mrb[0].mxu0 %v352
        %v483 = vpop.f32.mrb[0].mxu0
        %v484 = vadd.f32 0.0, %v483
        %v485 = vpop.f32.mrb[0].mxu0
        %v486 = vadd.f32 0.0, %v485
        %v487 = vpop.f32.mrb[0].mxu0
        %v488 = vpop.f32.mrb[0].mxu0
        %489 = vdwg.mxu0
        %v490 = vadd.f32 %v350, %v484
        %v491 = vadd.f32 %v351, %v486
        %492 = vst [vmem:[#allocation2] sm:$0xff] %v490
        %493 = vst [vmem:[#allocation2 + $0x8] sm:$0xff] %v491
        // Predicated region
        $region57: #{tpu_custom_call.1} parent=35 // pred_check
          %p494 = pneg %p344
        $region58: #{tpu_custom_call.1} parent=35 // pred_check_branch
          %496 = sbr.rel (%p494) target = $region60
        $region59: #{tpu_custom_call.1} parent=35 // pred_region
          %v497 = vld [vmem:[#allocation2] sm:$0xff]
          %v498 = vld [vmem:[#allocation2 + $0x8] sm:$0xff]
          %v499 = vld [vmem:[%s294] sm:$0x3]
          %v501 = vlaneseq
          %v502 = vshrl.u32 %v501, 7
          %v503 = vsub.s32 0, %v502
          %v504 = vrot.slane %v499, %v503
          %v505 = vlaneseq
          %v506 = vshrl.u32 %v505, 7
          %v507 = vsub.s32 1, %v506
          %v508 = vrot.slane %v499, %v507
          %v511 = vmul.f32 %v497, %v504
          %v512 = vmul.f32 %v498, %v508
          %v513 = vld [vmem:[%s303] sm:$0x3]
          %v515 = vlaneseq
          %v516 = vshrl.u32 %v515, 7
          %v517 = vsub.s32 0, %v516
          %v518 = vrot.slane %v513, %v517
          %v519 = vlaneseq
          %v520 = vshrl.u32 %v519, 7
          %v521 = vsub.s32 1, %v520
          %v522 = vrot.slane %v513, %v521
          %v525 = vadd.f32 %v511, %v518
          %v526 = vadd.f32 %v512, %v522
          %vm527 = vcmp.gt.f32.partialorder %v525, 0.0
          %vm528 = vcmp.gt.f32.partialorder %v526, 0.0
          %v529 = vmul.f32 %v525, 0.2
          %v530 = vmul.f32 %v526, 0.2
          %v531 = vsel %vm527, %v525, %v529
          %v532 = vsel %vm528, %v526, %v530
          %533 = vst [vmem:[%s337] sm:$0xff] %v531
          %534 = vst [vmem:[%s337 + $0x8] sm:$0xff] %v532
        $region60: #{tpu_custom_call.1} parent=35 // pred_fallthru
          _
        %s535 = sand.u32 %s162, 1
        %s536 = scalar_lea.sflag [#allocation5], %s535
        %s537 = sand.u32 %s162, 1
        %s538 = smul.addr %s537, 16
        %s539 = scalar_lea.vmem [#allocation11], %s538
        // Predicated region
        $region61: #{tpu_custom_call.1} parent=35 // pred_check
          %p540 = pneg %p172
        $region62: #{tpu_custom_call.1} parent=35 // pred_check_branch
          %542 = sbr.rel (%p540) target = $region64
        $region63: #{tpu_custom_call.1} parent=35 // pred_region
          %s543 = smul.u32 2, %s31
          %s545 = ssub.s32 256, 256
          %546 = vsyncadd %s536, %s545
          %s547 = smul.addr %s30, 16
          %s548 = sadd.s32 %s543, %s547
          %s549 = smul.addr %s548, 128
          %s550 = scalar_lea.hbm %s4, %s549
          %s552 = sshll.u32 %s539, 4
          %s553 = int_to_ptr.vmem [resolvable:$true] %s552
          %555 = dma.vmem_to_hbm [thread:$0]  %s553, 256, %s550, %s536
        $region64: #{tpu_custom_call.1} parent=35 // pred_fallthru
          _
      $region36: #{tpu_custom_call.1} parent=5 // pred_fallthru
        _
      %p556 = scmp.le.s32.totalorder 2, %s20
      // Predicated region
      $region65: #{tpu_custom_call.1} parent=5 // pred_check
        %p557 = pneg %p556
      $region66: #{tpu_custom_call.1} parent=5 // pred_check_branch
        %559 = sbr.rel (%p557) target = $region68
      $region67: #{tpu_custom_call.1} parent=5 // pred_region
        %s560 = ssub.s32 %s20, 2
        // Predicated region
        $region69: #{tpu_custom_call.1} parent=67 // pred_check
          %p561 = pneg %p178
        $region70: #{tpu_custom_call.1} parent=67 // pred_check_branch
          %563 = sbr.rel (%p561) target = $region72
        $region71: #{tpu_custom_call.1} parent=67 // pred_region
          %s564 = sand.u32 %s163, 1
          %s565 = scalar_lea.sflag [#allocation5], %s564
          %s566 = sand.u32 %s163, 1
          %s567 = smul.addr %s566, 16
          %s568 = scalar_lea.vmem [#allocation11], %s567
          %569 = dma.done %s565, 256
        $region72: #{tpu_custom_call.1} parent=67 // pred_fallthru
          _
      $region68: #{tpu_custom_call.1} parent=5 // pred_fallthru
        _
    $region6: #{tpu_custom_call.1} parent=1 // loop_footer
      %s24 = sadd.s32 1, %s20
    $region7: #{tpu_custom_call.1} parent=1 // loop_footer_branch
      %19 = sbr.rel target = $region3
    $region8: #{tpu_custom_call.1} parent=1 // loop_exit
      _
    %570 = vsyncpa [#allocation4], 1
    %s571 = scalar_lea.sflag [#allocation4], 1
    %572 = vsyncpa %s571, 1
    %573 = vsyncpa [#allocation7], 1
    %s574 = scalar_lea.sflag [#allocation7], 1
    %575 = vsyncpa %s574, 1
    %576 = vsyncpa [#allocation10], 1
    %s577 = scalar_lea.sflag [#allocation10], 1
    %578 = vsyncpa %s577, 1
    %579 = vsyncpa [#allocation5], 1
    %s580 = scalar_lea.sflag [#allocation5], 1
    %581 = vsyncpa %s580, 1

</llo_original>
